<compile_context>
chip_gen: v7x
topology: tpu7x:2x2x1
jax: 0.10.0
libtpu: 0.0.40
codegen_flags: <defaults>
</compile_context>

<pallas_src>
import functools

import jax
import jax.numpy as jnp
from jax import lax
from jax.experimental import pallas as pl
from jax.experimental.pallas import tpu as pltpu

EPS = 1e-5  # nn.InstanceNorm2d default eps


def _input_transition_kernel(col_ref, w_ref, g_ref, beta_ref, o_ref, *, N, HW):
    # ---- Conv2d(3x3, pad=1): one MXU matmul over the whole batch ----
    # (Cout, 9*Cin) @ (9*Cin, N*HW) -> (Cout, N*HW)
    conv = jnp.dot(w_ref[...], col_ref[...],
                   preferred_element_type=jnp.float32)

    gamma = g_ref[...]     # (Cout, 1)
    beta = beta_ref[...]   # (Cout, 1)
    inv_hw = 1.0 / HW      # trace-time constant

    # ---- InstanceNorm2d(affine) + ReLU, per batch element ----
    # Static (unrolled) loop; N is small.  Stats in ONE pass: sum / sum-sq.
    for n in range(N):
        y = conv[:, n * HW:(n + 1) * HW]                 # (Cout, HW), lane-aligned
        s = jnp.sum(y, axis=1, keepdims=True)            # (Cout, 1)
        ss = jnp.sum(y * y, axis=1, keepdims=True)       # (Cout, 1)
        mean = s * inv_hw
        var = ss * inv_hw - mean * mean                  # biased variance
        scale = gamma * lax.rsqrt(var + EPS)             # (Cout, 1)
        shift = beta - mean * scale                      # (Cout, 1)
        # normalize + affine + ReLU in one FMA + max, lane-dense store.
        o_ref[n] = jnp.maximum(y * scale + shift, 0.0)


def _im2col(x, KH, KW):
    """(N, Cin, H, W) -> lane-dense (KH*KW*Cin, N*H*W) slab.

    Row (kh*KW + kw)*Cin + ci, column n*H*W + h*W + w holds
    x[n, ci, h + kh - 1, w + kw - 1] (zero outside the image).
    """
    N, Cin, H, W = x.shape
    xp = jnp.pad(x, ((0, 0), (0, 0), (KH // 2, KH // 2), (KW // 2, KW // 2)))
    taps = [xp[:, :, kh:kh + H, kw:kw + W]
            for kh in range(KH) for kw in range(KW)]      # each (N, Cin, H, W)
    col = jnp.stack(taps, axis=0)                          # (KH*KW, N, Cin, H, W)
    col = col.transpose(0, 2, 1, 3, 4)                     # (KH*KW, Cin, N, H, W)
    return col.reshape(KH * KW * Cin, N * H * W)


def input_transition_2d(x, w, b, gamma, beta):
    """Forward of InputTransition2d.  x: (N, Cin, H, W) float32 (NCHW).

    `b` (the conv bias) is accepted for interface parity but unused:
    InstanceNorm subtracts the per-channel mean, so a per-channel conv bias
    cancels exactly and has zero effect on the forward output.
    """
    del b  # mathematically a no-op through InstanceNorm
    N, Cin, H, W = x.shape
    Cout, _, KH, KW = w.shape
    HW = H * W
    K9 = KH * KW * Cin

    # Glue (XLA side): im2col slab + weight re-layout so the kernel sees one
    # lane-dense matmul.  Negligible traffic at this size.
    # TODO(synk): at large H*W / N, build the im2col in-kernel instead
    # (pltpu.roll + edge masks on a flat slab), tile the HW axis (keeps blocks
    # within v7x's 64 MiB VMEM, output tile a multiple of 128 lanes), and
    # block >=2 batch elements per parallel grid step to use both v7x TCs.
    col = _im2col(x, KH, KW)                                    # (K9, N*HW)
    w_flat = jnp.transpose(w, (0, 2, 3, 1)).reshape(Cout, K9)   # (Cout, K9)
    g2 = gamma.reshape(Cout, 1)
    beta2 = beta.reshape(Cout, 1)

    kernel = functools.partial(_input_transition_kernel, N=N, HW=HW)

    out_flat = pl.pallas_call(
        kernel,
        out_shape=jax.ShapeDtypeStruct((N, Cout, HW), jnp.float32),
        grid_spec=pltpu.PrefetchScalarGridSpec(
            num_scalar_prefetch=0,
            grid=(1,),  # whole (tiny) problem in one step: no per-step overhead
            in_specs=[
                pl.BlockSpec((K9, N * HW), lambda i: (0, 0)),
                pl.BlockSpec((Cout, K9), lambda i: (0, 0)),
                pl.BlockSpec((Cout, 1), lambda i: (0, 0)),
                pl.BlockSpec((Cout, 1), lambda i: (0, 0)),
            ],
            out_specs=pl.BlockSpec((N, Cout, HW), lambda i: (0, 0, 0)),
        ),
        compiler_params=pltpu.CompilerParams(
            dimension_semantics=("arbitrary",)),
    )(col, w_flat, g2, beta2)

    return out_flat.reshape(N, Cout, H, W)


def reference(x, w, b, gamma, beta):
    """Pure-JAX reference mirroring the PyTorch module (bias included)."""
    y = lax.conv_general_dilated(
        x, w, window_strides=(1, 1), padding=((1, 1), (1, 1)),
        dimension_numbers=("NCHW", "OIHW", "NCHW"))
    y = y + b.reshape(1, -1, 1, 1)
    mean = jnp.mean(y, axis=(2, 3), keepdims=True)
    var = jnp.mean((y - mean) ** 2, axis=(2, 3), keepdims=True)
    y = (y - mean) / jnp.sqrt(var + EPS)
    y = y * gamma.reshape(1, -1, 1, 1) + beta.reshape(1, -1, 1, 1)
    return jnp.maximum(y, 0.0)


if __name__ == "__main__":
    # Module config from docstring: in_channels=1, out_channels=16.
    N, Cin, Cout, H, W = 2, 1, 16, 16, 16

    key = jax.random.PRNGKey(0)
    kx, kw, kb, kg, kbe = jax.random.split(key, 5)

    x = jax.random.normal(kx, (N, Cin, H, W), dtype=jnp.float32)
    # Deterministic synthetic parameters (not a checkpoint load).
    w = jax.random.normal(kw, (Cout, Cin, 3, 3), dtype=jnp.float32) * 0.1
    b = jax.random.normal(kb, (Cout,), dtype=jnp.float32) * 0.1
    gamma = 1.0 + 0.1 * jax.random.normal(kg, (Cout,), dtype=jnp.float32)
    beta = 0.1 * jax.random.normal(kbe, (Cout,), dtype=jnp.float32)

    out = jax.block_until_ready(input_transition_2d(x, w, b, gamma, beta))
    ref = jax.block_until_ready(reference(x, w, b, gamma, beta))

    assert out.shape == (N, Cout, H, W)
    assert jnp.allclose(out, ref, atol=1e-4, rtol=1e-4), \
        f"max abs err = {jnp.max(jnp.abs(out - ref))}"
    print("KERNEL_OK")
</pallas_src>

<mosaic_0001>
module attributes {stable_mosaic.version = 11 : i64} {
  func.func @_input_transition_kernel(%arg0: i32, %arg1: memref<9x512xf32, #tpu.memory_space<vmem>>, %arg2: memref<16x9xf32, #tpu.memory_space<vmem>>, %arg3: memref<16x1xf32, #tpu.memory_space<vmem>>, %arg4: memref<16x1xf32, #tpu.memory_space<vmem>>, %arg5: memref<2x16x256xf32, #tpu.memory_space<vmem>>) attributes {dimension_semantics = [#tpu.dimension_semantics<arbitrary>], iteration_bounds = array<i64: 1>, scalar_prefetch = 0 : i64, scratch_operands = 0 : i64, tpu.core_type = #tpu.core_type<tc>, window_params = [{pipeline_mode = #tpu.pipeline_mode<synchronous>, transform_indices = @transform_0, window_bounds = array<i64: 9, 512>}, {pipeline_mode = #tpu.pipeline_mode<synchronous>, transform_indices = @transform_1, window_bounds = array<i64: 16, 9>}, {pipeline_mode = #tpu.pipeline_mode<synchronous>, transform_indices = @transform_2, window_bounds = array<i64: 16, 1>}, {pipeline_mode = #tpu.pipeline_mode<synchronous>, transform_indices = @transform_3, window_bounds = array<i64: 16, 1>}, {pipeline_mode = #tpu.pipeline_mode<synchronous>, transform_indices = @transform_4, window_bounds = array<i64: 2, 16, 256>}]} {
    %c0 = arith.constant 0 : index
    %c0_0 = arith.constant 0 : index
    %0 = vector.load %arg2[%c0, %c0_0] : memref<16x9xf32, #tpu.memory_space<vmem>>, vector<16x9xf32>
    %c0_1 = arith.constant 0 : index
    %c0_2 = arith.constant 0 : index
    %1 = vector.load %arg1[%c0_1, %c0_2] : memref<9x512xf32, #tpu.memory_space<vmem>>, vector<9x512xf32>
    %cst = arith.constant dense<0.000000e+00> : vector<16x512xf32>
    %2 = tpu.matmul %0, %1, %cst {dimension_numbers = #tpu.dot_dimension_numbers<[1], [0], [0], [1], [0, 0, 1, 1], [], []>} : vector<16x9xf32>, vector<9x512xf32>, vector<16x512xf32> -> vector<16x512xf32>
    %c0_3 = arith.constant 0 : index
    %c0_4 = arith.constant 0 : index
    %3 = vector.load %arg3[%c0_3, %c0_4] : memref<16x1xf32, #tpu.memory_space<vmem>>, vector<16x1xf32>
    %c0_5 = arith.constant 0 : index
    %c0_6 = arith.constant 0 : index
    %4 = vector.load %arg4[%c0_5, %c0_6] : memref<16x1xf32, #tpu.memory_space<vmem>>, vector<16x1xf32>
    %5 = vector.extract_strided_slice %2 {offsets = [0, 0], sizes = [16, 256], strides = [1, 1]} : vector<16x512xf32> to vector<16x256xf32>
    %cst_7 = arith.constant dense<0.000000e+00> : vector<16xf32>
    %6 = vector.multi_reduction <add>, %5, %cst_7 [1] : vector<16x256xf32> to vector<16xf32>
    %7 = vector.shape_cast %6 : vector<16xf32> to vector<16x1xf32>
    %8 = arith.mulf %5, %5 : vector<16x256xf32>
    %cst_8 = arith.constant dense<0.000000e+00> : vector<16xf32>
    %9 = vector.multi_reduction <add>, %8, %cst_8 [1] : vector<16x256xf32> to vector<16xf32>
    %10 = vector.shape_cast %9 : vector<16xf32> to vector<16x1xf32>
    %cst_9 = arith.constant 3.906250e-03 : f32
    %11 = vector.broadcast %cst_9 : f32 to vector<16x1xf32>
    %12 = arith.mulf %7, %11 : vector<16x1xf32>
    %cst_10 = arith.constant 3.906250e-03 : f32
    %13 = vector.broadcast %cst_10 : f32 to vector<16x1xf32>
    %14 = arith.mulf %10, %13 : vector<16x1xf32>
    %15 = arith.mulf %12, %12 : vector<16x1xf32>
    %16 = arith.subf %14, %15 : vector<16x1xf32>
    %cst_11 = arith.constant 9.99999974E-6 : f32
    %17 = vector.broadcast %cst_11 : f32 to vector<16x1xf32>
    %18 = arith.addf %16, %17 : vector<16x1xf32>
    %19 = math.rsqrt %18 : vector<16x1xf32>
    %20 = arith.mulf %3, %19 : vector<16x1xf32>
    %21 = arith.mulf %12, %20 : vector<16x1xf32>
    %22 = arith.subf %4, %21 : vector<16x1xf32>
    %23 = vector.broadcast %20 : vector<16x1xf32> to vector<16x256xf32>
    %24 = arith.mulf %5, %23 : vector<16x256xf32>
    %25 = vector.broadcast %22 : vector<16x1xf32> to vector<16x256xf32>
    %26 = arith.addf %24, %25 : vector<16x256xf32>
    %cst_12 = arith.constant 0.000000e+00 : f32
    %27 = vector.broadcast %cst_12 : f32 to vector<16x256xf32>
    %28 = arith.maximumf %26, %27 : vector<16x256xf32>
    %c0_13 = arith.constant 0 : index
    %c0_14 = arith.constant 0 : index
    %c0_15 = arith.constant 0 : index
    %29 = vector.load %arg5[%c0_13, %c0_14, %c0_15] : memref<2x16x256xf32, #tpu.memory_space<vmem>>, vector<1x16x256xf32>
    %30 = vector.shape_cast %29 : vector<1x16x256xf32> to vector<16x256xf32>
    %31 = vector.shape_cast %28 : vector<16x256xf32> to vector<1x16x256xf32>
    tpu.vector_store %arg5[%c0_13, %c0_14, %c0_15], %31 {strides = array<i32>} : memref<2x16x256xf32, #tpu.memory_space<vmem>>, vector<1x16x256xf32>,
    %32 = vector.extract_strided_slice %2 {offsets = [0, 256], sizes = [16, 256], strides = [1, 1]} : vector<16x512xf32> to vector<16x256xf32>
    %cst_16 = arith.constant dense<0.000000e+00> : vector<16xf32>
    %33 = vector.multi_reduction <add>, %32, %cst_16 [1] : vector<16x256xf32> to vector<16xf32>
    %34 = vector.shape_cast %33 : vector<16xf32> to vector<16x1xf32>
    %35 = arith.mulf %32, %32 : vector<16x256xf32>
    %cst_17 = arith.constant dense<0.000000e+00> : vector<16xf32>
    %36 = vector.multi_reduction <add>, %35, %cst_17 [1] : vector<16x256xf32> to vector<16xf32>
    %37 = vector.shape_cast %36 : vector<16xf32> to vector<16x1xf32>
    %cst_18 = arith.constant 3.906250e-03 : f32
    %38 = vector.broadcast %cst_18 : f32 to vector<16x1xf32>
    %39 = arith.mulf %34, %38 : vector<16x1xf32>
    %cst_19 = arith.constant 3.906250e-03 : f32
    %40 = vector.broadcast %cst_19 : f32 to vector<16x1xf32>
    %41 = arith.mulf %37, %40 : vector<16x1xf32>
    %42 = arith.mulf %39, %39 : vector<16x1xf32>
    %43 = arith.subf %41, %42 : vector<16x1xf32>
    %cst_20 = arith.constant 9.99999974E-6 : f32
    %44 = vector.broadcast %cst_20 : f32 to vector<16x1xf32>
    %45 = arith.addf %43, %44 : vector<16x1xf32>
    %46 = math.rsqrt %45 : vector<16x1xf32>
    %47 = arith.mulf %3, %46 : vector<16x1xf32>
    %48 = arith.mulf %39, %47 : vector<16x1xf32>
    %49 = arith.subf %4, %48 : vector<16x1xf32>
    %50 = vector.broadcast %47 : vector<16x1xf32> to vector<16x256xf32>
    %51 = arith.mulf %32, %50 : vector<16x256xf32>
    %52 = vector.broadcast %49 : vector<16x1xf32> to vector<16x256xf32>
    %53 = arith.addf %51, %52 : vector<16x256xf32>
    %cst_21 = arith.constant 0.000000e+00 : f32
    %54 = vector.broadcast %cst_21 : f32 to vector<16x256xf32>
    %55 = arith.maximumf %53, %54 : vector<16x256xf32>
    %c1 = arith.constant 1 : index
    %c0_22 = arith.constant 0 : index
    %c0_23 = arith.constant 0 : index
    %56 = vector.load %arg5[%c1, %c0_22, %c0_23] : memref<2x16x256xf32, #tpu.memory_space<vmem>>, vector<1x16x256xf32>
    %57 = vector.shape_cast %56 : vector<1x16x256xf32> to vector<16x256xf32>
    %58 = vector.shape_cast %55 : vector<16x256xf32> to vector<1x16x256xf32>
    tpu.vector_store %arg5[%c1, %c0_22, %c0_23], %58 {strides = array<i32>} : memref<2x16x256xf32, #tpu.memory_space<vmem>>, vector<1x16x256xf32>,
    return
  }
  func.func @transform_0(%arg0: i32) -> (i32, i32) {
    %c0_i32 = arith.constant 0 : i32
    %c0_i32_0 = arith.constant 0 : i32
    %c0_i32_1 = arith.constant 0 : i32
    return %c0_i32, %c0_i32_0 : i32, i32
  }
  func.func @transform_1(%arg0: i32) -> (i32, i32) {
    %c0_i32 = arith.constant 0 : i32
    %c0_i32_0 = arith.constant 0 : i32
    %c0_i32_1 = arith.constant 0 : i32
    return %c0_i32, %c0_i32_0 : i32, i32
  }
  func.func @transform_2(%arg0: i32) -> (i32, i32) {
    %c0_i32 = arith.constant 0 : i32
    %c0_i32_0 = arith.constant 0 : i32
    %c0_i32_1 = arith.constant 0 : i32
    return %c0_i32, %c0_i32_0 : i32, i32
  }
  func.func @transform_3(%arg0: i32) -> (i32, i32) {
    %c0_i32 = arith.constant 0 : i32
    %c0_i32_0 = arith.constant 0 : i32
    %c0_i32_1 = arith.constant 0 : i32
    return %c0_i32, %c0_i32_0 : i32, i32
  }
  func.func @transform_4(%arg0: i32) -> (i32, i32, i32) {
    %c0_i32 = arith.constant 0 : i32
    %c0_i32_0 = arith.constant 0 : i32
    %c0_i32_1 = arith.constant 0 : i32
    %c0_i32_2 = arith.constant 0 : i32
    return %c0_i32, %c0_i32_0, %c0_i32_1 : i32, i32, i32
  }
}

</mosaic_0001>

<llo_original>
// kernel: tpu_custom_call.1
$region0: #{tpu_custom_call.1}
  #allocation0 [shape = 'u32[]', space=smem, size = 0x4, offset = 0x4, fixed_abs, tag = 'smem constant byte address 0x4 - core index']
  #allocation1 [shape = 'u32[144,128]{1,0:T(1,128)}', space=vmem, size = 0x12000, scoped, tag = 'internal scratch']
  %s0 = inlined_call_operand.hbm [shape: f32[9,512], index: 0, kind: input, shape index: {}]
  %s1 = inlined_call_operand.vmem [shape: f32[16,9], index: 1, kind: input, shape index: {}]
  %s2 = inlined_call_operand.vmem [shape: f32[16,1], index: 2, kind: input, shape index: {}]
  %s3 = inlined_call_operand.vmem [shape: f32[16,1], index: 3, kind: input, shape index: {}]
  %s4 = inlined_call_operand.hbm [shape: f32[2,16,256], index: 4, kind: output, shape index: {}]
  %s5 = sld [smem:[#allocation0]]
  $region30: #{tpu_custom_call.1} parent=0
    _
  %s7 = ssub.s32 1, %s5
  %s8 = scalar_select 0, %s7, %s5
  $region1: #{tpu_custom_call.1} parent=0
    #allocation2 [shape = 'u8[32768]{0}', space=vmem, size = 0x8000, scoped, tag = 'input window, operand 0, single buffered']
    #allocation3 [shape = 's32[1]{0}', space=sflag, size = 0x4, scoped, tag = 'scoped memory for tpu_custom_call.1']
    #allocation4 [shape = 's32[1]{0}', space=sflag, size = 0x4, scoped, tag = 'scoped memory for tpu_custom_call.1']
    #allocation5 [shape = 'u8[32768]{0}', space=vmem, size = 0x8000, scoped, tag = 'output window, operand 0, single buffered']
    %9 = vsyncpa [#allocation3], 0
    %10 = vsyncpa [#allocation4], 0
    // Predicated region
    $region2: #{tpu_custom_call.1} parent=1 // pred_check
      _
    $region3: #{tpu_custom_call.1} parent=1 // pred_check_branch
      %12 = sbr.rel (0) target = $region5
    $region4: #{tpu_custom_call.1} parent=1 // pred_region
      %s14 = ssub.s32 1024, 1024
      %15 = vsyncadd [#allocation3], %s14
      %s16 = sshll.u32 [#allocation2], 4
      %s17 = int_to_ptr.vmem [resolvable:$true] %s16
      %22 = dma.hbm_to_vmem [thread:$0]  %s0, 1024, %s17, [#allocation3], 512, 512, 32
    $region5: #{tpu_custom_call.1} parent=1 // pred_fallthru
      _
    // Predicated region
    $region6: #{tpu_custom_call.1} parent=1 // pred_check
      _
    $region7: #{tpu_custom_call.1} parent=1 // pred_check_branch
      %24 = sbr.rel (0) target = $region9
    $region8: #{tpu_custom_call.1} parent=1 // pred_region
      _
    $region9: #{tpu_custom_call.1} parent=1 // pred_fallthru
      _
    // Predicated region
    $region10: #{tpu_custom_call.1} parent=1 // pred_check
      _
    $region11: #{tpu_custom_call.1} parent=1 // pred_check_branch
      %26 = sbr.rel (0) target = $region13
    $region12: #{tpu_custom_call.1} parent=1 // pred_region
      _
    $region13: #{tpu_custom_call.1} parent=1 // pred_fallthru
      _
    // Predicated region
    $region14: #{tpu_custom_call.1} parent=1 // pred_check
      _
    $region15: #{tpu_custom_call.1} parent=1 // pred_check_branch
      %28 = sbr.rel (0) target = $region17
    $region16: #{tpu_custom_call.1} parent=1 // pred_region
      _
    $region17: #{tpu_custom_call.1} parent=1 // pred_fallthru
      _
    // Predicated region
    $region18: #{tpu_custom_call.1} parent=1 // pred_check
      _
    $region19: #{tpu_custom_call.1} parent=1 // pred_check_branch
      %30 = sbr.rel (0) target = $region21
    $region20: #{tpu_custom_call.1} parent=1 // pred_region
      %31 = dma.done [#allocation3], 1024
    $region21: #{tpu_custom_call.1} parent=1 // pred_fallthru
      _
    %v32 = vld [vmem:[%s1] sm:$0xff]
    %v33 = vld [vmem:[%s1 + $0x8] sm:$0xff]
    %v34 = vld [vmem:[#allocation2] sm:$0xff]
    %v35 = vld [vmem:[#allocation2 + $0x8] sm:$0xff]
    %v36 = vld [vmem:[#allocation2 + $0x10] sm:$0xff]
    %v37 = vld [vmem:[#allocation2 + $0x18] sm:$0xff]
    %v38 = vld [vmem:[#allocation2 + $0x20] sm:$0x1]
    %v39 = vld [vmem:[#allocation2 + $0x28] sm:$0x1]
    %v40 = vld [vmem:[#allocation2 + $0x30] sm:$0x1]
    %v41 = vld [vmem:[#allocation2 + $0x38] sm:$0x1]
    %vm42 = vcmask 72704
    %v44 = vsel %vm42, %v32, 0
    %v47 = vsel %vm42, %v33, 0
    %vm49 = vcmask 1040384
    %v51 = vsel %vm49, %v38, 0
    %v54 = vsel %vm49, %v39, 0
    %v57 = vsel %vm49, %v40, 0
    %v60 = vsel %vm49, %v41, 0
    %62 = vmatprep.subr.mxu0 %v35
    %63 = vmatpush1.msra.mxu0 %v34
    %64 = vmatprep.subr.mxu0 %v54
    %65 = vmatpush1.msra.mxu0 %v51
    %66 = vmatprep.subr.mxu0 0.0
    %67 = vmatpush1.msra.mxu0 0.0
    %68 = vmatprep.subr.mxu0 0.0
    %69 = vmatpush1.msra.mxu0 0.0
    %70 = vmatprep.subr.mxu0 0.0
    %71 = vmatpush1.msra.mxu0 0.0
    %72 = vmatprep.subr.mxu0 0.0
    %73 = vmatpush1.msra.mxu0 0.0
    %74 = vmatprep.subr.mxu0 0.0
    %75 = vmatpush1.msra.mxu0 0.0
    %76 = vmatprep.subr.mxu0 0.0
    %77 = vmatpush1.msra.mxu0 0.0
    %78 = vmatprep.subr.mxu0 0.0
    %79 = vmatpush1.msra.mxu0 0.0
    %80 = vmatprep.subr.mxu0 0.0
    %81 = vmatpush1.msra.mxu0 0.0
    %82 = vmatprep.subr.mxu0 0.0
    %83 = vmatpush1.msra.mxu0 0.0
    %84 = vmatprep.subr.mxu0 0.0
    %85 = vmatpush1.msra.mxu0 0.0
    %86 = vmatprep.subr.mxu0 0.0
    %87 = vmatpush1.msra.mxu0 0.0
    %88 = vmatprep.subr.mxu0 0.0
    %89 = vmatpush1.msra.mxu0 0.0
    %90 = vmatprep.subr.mxu0 0.0
    %91 = vmatpush1.msra.mxu0 0.0
    %92 = vmatprep.subr.mxu0 0.0
    %93 = vmatpush1.msra.mxu0 0.0
    %94 = vmatprep.subr.mxu0 0.0
    %95 = vmatpush1.msra.mxu0 0.0
    %96 = vmatprep.subr.mxu0 0.0
    %97 = vmatpush1.msra.mxu0 0.0
    %98 = vmatprep.subr.mxu0 0.0
    %99 = vmatpush1.msra.mxu0 0.0
    %100 = vmatprep.subr.mxu0 0.0
    %101 = vmatpush1.msra.mxu0 0.0
    %102 = vmatprep.subr.mxu0 0.0
    %103 = vmatpush1.msra.mxu0 0.0
    %104 = vmatprep.subr.mxu0 0.0
    %105 = vmatpush1.msra.mxu0 0.0
    %106 = vmatprep.subr.mxu0 0.0
    %107 = vmatpush1.msra.mxu0 0.0
    %108 = vmatprep.subr.mxu0 0.0
    %109 = vmatpush1.msra.mxu0 0.0
    %110 = vmatprep.subr.mxu0 0.0
    %111 = vmatpush1.msra.mxu0 0.0
    %112 = vmatprep.subr.mxu0 0.0
    %113 = vmatpush1.msra.mxu0 0.0
    %114 = vmatprep.subr.mxu0 0.0
    %115 = vmatpush1.msra.mxu0 0.0
    %116 = vmatprep.subr.mxu0 0.0
    %117 = vmatpush1.msra.mxu0 0.0
    %118 = vmatprep.subr.mxu0 0.0
    %119 = vmatpush1.msra.mxu0 0.0
    %120 = vmatprep.subr.mxu0 0.0
    %121 = vmatpush1.msra.mxu0 0.0
    %122 = vmatprep.subr.mxu0 0.0
    %123 = vmatpush1.msra.mxu0 0.0
    %124 = vmatprep.subr.mxu0 0.0
    %125 = vmatpush1.msra.mxu0 0.0
    %126 = vmatprep.mubr.f32.mxu0 0.0
    %127 = vmatmul.mubr.f32.gmra.mrb[0].mxu0 %v44
    %v128 = vpop.f32.mrb[0].mxu0
    %v129 = vadd.f32 0.0, %v128
    %v130 = vpop.f32.mrb[0].mxu0
    %v131 = vadd.f32 0.0, %v130
    %132 = vmatprep.mubr.f32.mxu0 0.0
    %133 = vmatmul.mubr.f32.gmra.mrb[0].mxu0 %v47
    %v134 = vpop.f32.mrb[0].mxu0
    %v135 = vadd.f32 0.0, %v134
    %v136 = vpop.f32.mrb[0].mxu0
    %v137 = vadd.f32 0.0, %v136
    %138 = vdwg.mxu0
    %139 = vmatprep.subr.mxu0 %v37
    %140 = vmatpush1.msra.mxu0 %v36
    %141 = vmatprep.subr.mxu0 %v60
    %142 = vmatpush1.msra.mxu0 %v57
    %143 = vmatprep.subr.mxu0 0.0
    %144 = vmatpush1.msra.mxu0 0.0
    %145 = vmatprep.subr.mxu0 0.0
    %146 = vmatpush1.msra.mxu0 0.0
    %147 = vmatprep.subr.mxu0 0.0
    %148 = vmatpush1.msra.mxu0 0.0
    %149 = vmatprep.subr.mxu0 0.0
    %150 = vmatpush1.msra.mxu0 0.0
    %151 = vmatprep.subr.mxu0 0.0
    %152 = vmatpush1.msra.mxu0 0.0
    %153 = vmatprep.subr.mxu0 0.0
    %154 = vmatpush1.msra.mxu0 0.0
    %155 = vmatprep.subr.mxu0 0.0
    %156 = vmatpush1.msra.mxu0 0.0
    %157 = vmatprep.subr.mxu0 0.0
    %158 = vmatpush1.msra.mxu0 0.0
    %159 = vmatprep.subr.mxu0 0.0
    %160 = vmatpush1.msra.mxu0 0.0
    %161 = vmatprep.subr.mxu0 0.0
    %162 = vmatpush1.msra.mxu0 0.0
    %163 = vmatprep.subr.mxu0 0.0
    %164 = vmatpush1.msra.mxu0 0.0
    %165 = vmatprep.subr.mxu0 0.0
    %166 = vmatpush1.msra.mxu0 0.0
    %167 = vmatprep.subr.mxu0 0.0
    %168 = vmatpush1.msra.mxu0 0.0
    %169 = vmatprep.subr.mxu0 0.0
    %170 = vmatpush1.msra.mxu0 0.0
    %171 = vmatprep.subr.mxu0 0.0
    %172 = vmatpush1.msra.mxu0 0.0
    %173 = vmatprep.subr.mxu0 0.0
    %174 = vmatpush1.msra.mxu0 0.0
    %175 = vmatprep.subr.mxu0 0.0
    %176 = vmatpush1.msra.mxu0 0.0
    %177 = vmatprep.subr.mxu0 0.0
    %178 = vmatpush1.msra.mxu0 0.0
    %179 = vmatprep.subr.mxu0 0.0
    %180 = vmatpush1.msra.mxu0 0.0
    %181 = vmatprep.subr.mxu0 0.0
    %182 = vmatpush1.msra.mxu0 0.0
    %183 = vmatprep.subr.mxu0 0.0
    %184 = vmatpush1.msra.mxu0 0.0
    %185 = vmatprep.subr.mxu0 0.0
    %186 = vmatpush1.msra.mxu0 0.0
    %187 = vmatprep.subr.mxu0 0.0
    %188 = vmatpush1.msra.mxu0 0.0
    %189 = vmatprep.subr.mxu0 0.0
    %190 = vmatpush1.msra.mxu0 0.0
    %191 = vmatprep.subr.mxu0 0.0
    %192 = vmatpush1.msra.mxu0 0.0
    %193 = vmatprep.subr.mxu0 0.0
    %194 = vmatpush1.msra.mxu0 0.0
    %195 = vmatprep.subr.mxu0 0.0
    %196 = vmatpush1.msra.mxu0 0.0
    %197 = vmatprep.subr.mxu0 0.0
    %198 = vmatpush1.msra.mxu0 0.0
    %199 = vmatprep.subr.mxu0 0.0
    %200 = vmatpush1.msra.mxu0 0.0
    %201 = vmatprep.subr.mxu0 0.0
    %202 = vmatpush1.msra.mxu0 0.0
    %203 = vmatprep.mubr.f32.mxu0 0.0
    %204 = vmatmul.mubr.f32.gmra.mrb[0].mxu0 %v44
    %v205 = vpop.f32.mrb[0].mxu0
    %v206 = vadd.f32 0.0, %v205
    %v207 = vpop.f32.mrb[0].mxu0
    %v208 = vadd.f32 0.0, %v207
    %209 = vmatprep.mubr.f32.mxu0 0.0
    %210 = vmatmul.mubr.f32.gmra.mrb[0].mxu0 %v47
    %v211 = vpop.f32.mrb[0].mxu0
    %v212 = vadd.f32 0.0, %v211
    %v213 = vpop.f32.mrb[0].mxu0
    %v214 = vadd.f32 0.0, %v213
    %215 = vdwg.mxu0
    %v216 = vld [vmem:[%s2] sm:$0xff]
    %v217 = vld [vmem:[%s2 + $0x8] sm:$0xff]
    %v218 = vld [vmem:[%s3] sm:$0xff]
    %v219 = vld [vmem:[%s3 + $0x8] sm:$0xff]
    %v220 = vadd.f32 %v129, %v131
    %221 = vadd.xlane.f32.xlu0 %v220
    %v222 = vpop.xlane.xlu0 %221
    %v223 = vadd.f32 %v135, %v137
    %224 = vadd.xlane.f32.xlu0 %v223
    %v225 = vpop.xlane.xlu0 %224
    %v226 = vmul.f32 %v129, %v129
    %v227 = vmul.f32 %v131, %v131
    %v228 = vmul.f32 %v135, %v135
    %v229 = vmul.f32 %v137, %v137
    %v230 = vadd.f32 %v226, %v227
    %231 = vadd.xlane.f32.xlu0 %v230
    %v232 = vpop.xlane.xlu0 %231
    %v233 = vadd.f32 %v228, %v229
    %234 = vadd.xlane.f32.xlu0 %v233
    %v235 = vpop.xlane.xlu0 %234
    %v236 = vmul.f32 %v222, 0.00390625
    %v237 = vmul.f32 %v225, 0.00390625
    %v238 = vmul.f32 %v232, 0.00390625
    %v239 = vmul.f32 %v235, 0.00390625
    %v240 = vmul.f32 %v236, %v236
    %v241 = vmul.f32 %v237, %v237
    %v242 = vsub.f32 %v238, %v240
    %v243 = vsub.f32 %v239, %v241
    %v244 = vadd.f32 %v242, 1e-05
    %v245 = vadd.f32 %v243, 1e-05
    %v246 = vrsqrt.pop %v244
    %v247 = vrsqrt.pop %v245
    %v248 = vmul.f32 %v216, %v246
    %v249 = vmul.f32 %v217, %v247
    %v250 = vmul.f32 %v236, %v248
    %v251 = vmul.f32 %v237, %v249
    %v252 = vsub.f32 %v218, %v250
    %v253 = vsub.f32 %v219, %v251
    %255 = vset.pattern.permute.xlu0 0
    %256 = vperm.xlu0 %255, %v248
    %v257 = vpop.permute.xlu0 %256
    %260 = vset.pattern.permute.xlu0 0
    %261 = vperm.xlu0 %260, %v249
    %v262 = vpop.permute.xlu0 %261
    %v264 = vmul.f32 %v129, %v257
    %v265 = vmul.f32 %v131, %v257
    %v266 = vmul.f32 %v135, %v262
    %v267 = vmul.f32 %v137, %v262
    %269 = vset.pattern.permute.xlu0 0
    %270 = vperm.xlu0 %269, %v252
    %v271 = vpop.permute.xlu0 %270
    %274 = vset.pattern.permute.xlu0 0
    %275 = vperm.xlu0 %274, %v253
    %v276 = vpop.permute.xlu0 %275
    %v278 = vadd.f32 %v264, %v271
    %v279 = vadd.f32 %v265, %v271
    %v280 = vadd.f32 %v266, %v276
    %v281 = vadd.f32 %v267, %v276
    %v282 = vmax.f32 %v278, 0.0
    %v283 = vmax.f32 %v279, 0.0
    %v284 = vmax.f32 %v280, 0.0
    %v285 = vmax.f32 %v281, 0.0
    %286 = vst [vmem:[#allocation5] sm:$0xff] %v282
    %287 = vst [vmem:[#allocation5 + $0x8] sm:$0xff] %v283
    %288 = vst [vmem:[#allocation5 + $0x10] sm:$0xff] %v284
    %289 = vst [vmem:[#allocation5 + $0x18] sm:$0xff] %v285
    %v290 = vadd.f32 %v206, %v208
    %291 = vadd.xlane.f32.xlu0 %v290
    %v292 = vpop.xlane.xlu0 %291
    %v293 = vadd.f32 %v212, %v214
    %294 = vadd.xlane.f32.xlu0 %v293
    %v295 = vpop.xlane.xlu0 %294
    %v296 = vmul.f32 %v206, %v206
    %v297 = vmul.f32 %v208, %v208
    %v298 = vmul.f32 %v212, %v212
    %v299 = vmul.f32 %v214, %v214
    %v300 = vadd.f32 %v296, %v297
    %301 = vadd.xlane.f32.xlu0 %v300
    %v302 = vpop.xlane.xlu0 %301
    %v303 = vadd.f32 %v298, %v299
    %304 = vadd.xlane.f32.xlu0 %v303
    %v305 = vpop.xlane.xlu0 %304
    %v306 = vmul.f32 %v292, 0.00390625
    %v307 = vmul.f32 %v295, 0.00390625
    %v308 = vmul.f32 %v302, 0.00390625
    %v309 = vmul.f32 %v305, 0.00390625
    %v310 = vmul.f32 %v306, %v306
    %v311 = vmul.f32 %v307, %v307
    %v312 = vsub.f32 %v308, %v310
    %v313 = vsub.f32 %v309, %v311
    %v314 = vadd.f32 %v312, 1e-05
    %v315 = vadd.f32 %v313, 1e-05
    %v316 = vrsqrt.pop %v314
    %v317 = vrsqrt.pop %v315
    %v318 = vmul.f32 %v216, %v316
    %v319 = vmul.f32 %v217, %v317
    %v320 = vmul.f32 %v306, %v318
    %v321 = vmul.f32 %v307, %v319
    %v322 = vsub.f32 %v218, %v320
    %v323 = vsub.f32 %v219, %v321
    %325 = vset.pattern.permute.xlu0 0
    %326 = vperm.xlu0 %325, %v318
    %v327 = vpop.permute.xlu0 %326
    %330 = vset.pattern.permute.xlu0 0
    %331 = vperm.xlu0 %330, %v319
    %v332 = vpop.permute.xlu0 %331
    %v334 = vmul.f32 %v206, %v327
    %v335 = vmul.f32 %v208, %v327
    %v336 = vmul.f32 %v212, %v332
    %v337 = vmul.f32 %v214, %v332
    %339 = vset.pattern.permute.xlu0 0
    %340 = vperm.xlu0 %339, %v322
    %v341 = vpop.permute.xlu0 %340
    %344 = vset.pattern.permute.xlu0 0
    %345 = vperm.xlu0 %344, %v323
    %v346 = vpop.permute.xlu0 %345
    %v348 = vadd.f32 %v334, %v341
    %v349 = vadd.f32 %v335, %v341
    %v350 = vadd.f32 %v336, %v346
    %v351 = vadd.f32 %v337, %v346
    %v352 = vmax.f32 %v348, 0.0
    %v353 = vmax.f32 %v349, 0.0
    %v354 = vmax.f32 %v350, 0.0
    %v355 = vmax.f32 %v351, 0.0
    %s356 = scalar_lea.vmem [#allocation5], 32
    %357 = vst [vmem:[%s356] sm:$0xff] %v352
    %358 = vst [vmem:[%s356 + $0x8] sm:$0xff] %v353
    %359 = vst [vmem:[%s356 + $0x10] sm:$0xff] %v354
    %360 = vst [vmem:[%s356 + $0x18] sm:$0xff] %v355
    // Predicated region
    $region22: #{tpu_custom_call.1} parent=1 // pred_check
      _
    $region23: #{tpu_custom_call.1} parent=1 // pred_check_branch
      %362 = sbr.rel (0) target = $region25
    $region24: #{tpu_custom_call.1} parent=1 // pred_region
      %s364 = ssub.s32 1024, 1024
      %365 = vsyncadd [#allocation4], %s364
      %s366 = sshll.u32 [#allocation5], 4
      %s367 = int_to_ptr.vmem [resolvable:$true] %s366
      %372 = dma.vmem_to_hbm [thread:$0]  %s367, 1024, %s4, [#allocation4], 256, 256, 16
    $region25: #{tpu_custom_call.1} parent=1 // pred_fallthru
      _
    // Predicated region
    $region26: #{tpu_custom_call.1} parent=1 // pred_check
      _
    $region27: #{tpu_custom_call.1} parent=1 // pred_check_branch
      %374 = sbr.rel (0) target = $region29
    $region28: #{tpu_custom_call.1} parent=1 // pred_region
      %375 = dma.done [#allocation4], 1024
    $region29: #{tpu_custom_call.1} parent=1 // pred_fallthru
      _
    %376 = vsyncpa [#allocation3], 1
    %377 = vsyncpa [#allocation4], 1

</llo_original>
